<compile_context>
chip_gen: v7x
topology: tpu7x:2x2x1
jax: 0.10.0
libtpu: 0.0.40
codegen_flags: <defaults>
</compile_context>

<pallas_src>
import jax
import jax.numpy as jnp
from jax.experimental import pallas as pl
from jax.experimental.pallas import tpu as pltpu

LANES = 128          # vreg lane width (last-dim tile)
SUBLANES = 8         # f32 sublane multiple
MAX_TILE_ROWS = 4096  # (4096, 128) f32 = 2 MiB/buffer; 2 ops x 2 bufs = 8 MiB < 16 MiB (v5e scoped VMEM)

# Operand index of the lane-dense x slab inside pallas_call's argument list
# (after the two SMEM scalars). Used for input_output_aliases.
_X_OPERAND_INDEX = 2


def _round_up(x, m):
    return ((x + m - 1) // m) * m


def linear_kernel(w_ref, b_ref, x_ref, o_ref):
    # w_ref, b_ref are SMEM scalars; x_ref/o_ref are (tile_r, 128) VMEM tiles.
    # Pure VPU multiply-add; the kernel is HBM-bandwidth bound.
    o_ref[...] = x_ref[...] * w_ref[0] + b_ref[0]


@jax.jit
def linear_forward(x, weight, bias):
    """x: (N, 1) f32, weight: (1, 1) f32, bias: (1,) f32 -> (N, 1) f32."""
    n, in_features = x.shape
    assert in_features == 1, "LinearModel uses nn.Linear(1, 1)"
    # Tile rounding below assumes the f32 (8, 128) min tile; other dtypes would
    # need a different sublane multiple (16 for bf16, 32 for int8).
    assert x.dtype == jnp.float32, "kernel tiling assumes float32 input"
    w_scalar = weight.reshape((1,))   # (1,1) -> (1,); W^T == W for 1x1
    b_scalar = bias.reshape((1,))

    # --- Lane-dense repack: (N, 1) -> (rows, 128) slab, minimal padding ---
    flat = x.reshape((-1,))
    total = flat.shape[0]
    # Pad only to the next 8*128 boundary (<= 1023 extra elements, ~4 KiB);
    # the grid's partial last block handles the rest via Pallas masking.
    padded_total = _round_up(total, SUBLANES * LANES)
    if padded_total != total:
        flat = jnp.pad(flat, (0, padded_total - total))
    rows = padded_total // LANES               # multiple of 8
    x2d = flat.reshape((rows, LANES))

    # Tile: as large as allowed (<= 2 MiB/buffer keeps v5e's 16 MiB scoped VMEM
    # happy with double-buffering) while keeping >= 2 grid steps whenever the
    # input is big enough, so v7x's 2 TensorCores both get work.
    half_rows = _round_up((rows + 1) // 2, SUBLANES)
    tile_r = max(SUBLANES, min(MAX_TILE_ROWS, half_rows))
    grid = (pl.cdiv(rows, tile_r),)            # partial last block is masked

    out2d = pl.pallas_call(
        linear_kernel,
        out_shape=jax.ShapeDtypeStruct((rows, LANES), x.dtype),
        grid=grid,
        in_specs=[
            pl.BlockSpec(memory_space=pltpu.SMEM),            # weight scalar
            pl.BlockSpec(memory_space=pltpu.SMEM),            # bias scalar
            pl.BlockSpec((tile_r, LANES), lambda i: (i, 0)),  # lane-dense x tile
        ],
        out_specs=pl.BlockSpec((tile_r, LANES), lambda i: (i, 0)),
        # Donate the (padded) input slab to the output; avoids a second
        # N-sized HBM allocation. Index counts the two SMEM scalars first.
        input_output_aliases={_X_OPERAND_INDEX: 0},
        compiler_params=pltpu.CompilerParams(
            dimension_semantics=("parallel",),   # shards grid across v7x's 2 TCs
        ),
    )(w_scalar, b_scalar, x2d)

    # Undo the repack: slab -> (N, 1). Slice only if we actually padded.
    flat_out = out2d.reshape((-1,))
    if padded_total != total:
        flat_out = flat_out[:total]
    return flat_out.reshape((n, 1))


if __name__ == "__main__":
    key = jax.random.PRNGKey(0)
    kx, kw, kb, kx2 = jax.random.split(key, 4)

    # Parameters with the shapes of torch.nn.Linear(1, 1).
    weight = jax.random.normal(kw, (1, 1), dtype=jnp.float32)  # W: (out=1, in=1)
    bias = jax.random.normal(kb, (1,), dtype=jnp.float32)      # b: (1,)

    # Small input consistent with the module's forward: (batch, 1).
    x = jax.random.normal(kx, (8, 1), dtype=jnp.float32)
    y = jax.block_until_ready(linear_forward(x, weight, bias))
    y_ref = x @ weight.T + bias
    assert y.shape == (8, 1)
    assert jnp.allclose(y, y_ref, atol=1e-6), "mismatch vs reference (small)"

    # A larger batch to exercise padding + a multi-step (2-TC-friendly) grid.
    x_big = jax.random.normal(kx2, (100_000, 1), dtype=jnp.float32)
    y_big = jax.block_until_ready(linear_forward(x_big, weight, bias))
    y_big_ref = x_big @ weight.T + bias
    assert y_big.shape == (100_000, 1)
    assert jnp.allclose(y_big, y_big_ref, atol=1e-6), "mismatch vs reference (big)"

    print("KERNEL_OK")
</pallas_src>

<mosaic_0001>
module attributes {stable_mosaic.version = 11 : i64} {
  func.func @linear_kernel(%arg0: i32, %arg1: memref<1xf32, #tpu.memory_space<smem>>, %arg2: memref<1xf32, #tpu.memory_space<smem>>, %arg3: memref<8x128xf32, #tpu.memory_space<vmem>>, %arg4: memref<8x128xf32, #tpu.memory_space<vmem>>) attributes {dimension_semantics = [#tpu.dimension_semantics<parallel>], iteration_bounds = array<i64: 1>, scalar_prefetch = 0 : i64, scratch_operands = 0 : i64, tpu.core_type = #tpu.core_type<tc>, window_params = [{transform_indices = @transform_0, window_bounds = array<i64: 1>}, {transform_indices = @transform_1, window_bounds = array<i64: 1>}, {transform_indices = @transform_2, window_bounds = array<i64: 8, 128>}, {transform_indices = @transform_3, window_bounds = array<i64: 8, 128>}]} {
    %c0 = arith.constant 0 : index
    %c0_0 = arith.constant 0 : index
    %0 = vector.load %arg3[%c0, %c0_0] : memref<8x128xf32, #tpu.memory_space<vmem>>, vector<8x128xf32>
    %c0_1 = arith.constant 0 : index
    %1 = memref.load %arg1[%c0_1] : memref<1xf32, #tpu.memory_space<smem>>
    %2 = vector.broadcast %1 : f32 to vector<8x128xf32>
    %3 = arith.mulf %0, %2 : vector<8x128xf32>
    %c0_2 = arith.constant 0 : index
    %4 = memref.load %arg2[%c0_2] : memref<1xf32, #tpu.memory_space<smem>>
    %5 = vector.broadcast %4 : f32 to vector<8x128xf32>
    %6 = arith.addf %3, %5 : vector<8x128xf32>
    %c0_3 = arith.constant 0 : index
    %c0_4 = arith.constant 0 : index
    %7 = vector.load %arg4[%c0_3, %c0_4] : memref<8x128xf32, #tpu.memory_space<vmem>>, vector<8x128xf32>
    tpu.vector_store %arg4[%c0_3, %c0_4], %6 {strides = array<i32>} : memref<8x128xf32, #tpu.memory_space<vmem>>, vector<8x128xf32>,
    return
  }
  func.func @transform_0(%arg0: i32) -> i32 {
    %c0_i32 = arith.constant 0 : i32
    %c0_i32_0 = arith.constant 0 : i32
    return %c0_i32 : i32
  }
  func.func @transform_1(%arg0: i32) -> i32 {
    %c0_i32 = arith.constant 0 : i32
    %c0_i32_0 = arith.constant 0 : i32
    return %c0_i32 : i32
  }
  func.func @transform_2(%arg0: i32) -> (i32, i32) {
    %c0_i32 = arith.constant 0 : i32
    %c0_i32_0 = arith.constant 0 : i32
    return %arg0, %c0_i32 : i32, i32
  }
  func.func @transform_3(%arg0: i32) -> (i32, i32) {
    %c0_i32 = arith.constant 0 : i32
    %c0_i32_0 = arith.constant 0 : i32
    return %arg0, %c0_i32 : i32, i32
  }
}

</mosaic_0001>

<llo_original>
// kernel: linear_forward.1
$region0: #{linear_forward.1}
  #allocation0 [shape = 'u32[]', space=smem, size = 0x4, offset = 0x4, fixed_abs, tag = 'smem constant byte address 0x4 - core index']
  #allocation1 [shape = 'u32[144,128]{1,0:T(1,128)}', space=vmem, size = 0x12000, scoped, tag = 'internal scratch']
  #allocation2 [shape = 'f32[1]{0:T(128)S(6)}', space=smem, size = 0x200, scoped, tag = 'scoped memory for linear_forward.1']
  #allocation3 [shape = 'f32[1]{0:T(128)S(6)}', space=smem, size = 0x200, scoped, tag = 'scoped memory for linear_forward.1']
  %s0 = inlined_call_operand.<no memory space> [shape: f32[1], index: 0, kind: input, shape index: {}]
  %s1 = inlined_call_operand.<no memory space> [shape: f32[1], index: 1, kind: input, shape index: {}]
  %s2 = inlined_call_operand.vmem [shape: f32[8,128], index: 2, kind: input, shape index: {}, may-alias: {2,3}]
  %s3 = inlined_call_operand.vmem [shape: f32[8,128], index: 3, kind: output, shape index: {}, may-alias: {2,3}]
  %s4 = sld [smem:[#allocation0]]
  $region22: #{linear_forward.1} parent=0
    _
  %s6 = ssub.s32 1, %s4
  %s7 = scalar_select 0, %s6, %s4
  %8 = sst [smem:[#allocation2]] %s0
  %9 = sst [smem:[#allocation3]] %s1
  // Predicated region
  $region2: #{linear_forward.1} parent=0 // pred_check
    _
  $region3: #{linear_forward.1} parent=0 // pred_check_branch
    %11 = sbr.rel (0) target = $region5
  $region4: #{linear_forward.1} parent=0 // pred_region
    _
  $region5: #{linear_forward.1} parent=0 // pred_fallthru
    _
  // Predicated region
  $region6: #{linear_forward.1} parent=0 // pred_check
    _
  $region7: #{linear_forward.1} parent=0 // pred_check_branch
    %13 = sbr.rel (0) target = $region9
  $region8: #{linear_forward.1} parent=0 // pred_region
    _
  $region9: #{linear_forward.1} parent=0 // pred_fallthru
    _
  // Predicated region
  $region10: #{linear_forward.1} parent=0 // pred_check
    _
  $region11: #{linear_forward.1} parent=0 // pred_check_branch
    %15 = sbr.rel (0) target = $region13
  $region12: #{linear_forward.1} parent=0 // pred_region
    _
  $region13: #{linear_forward.1} parent=0 // pred_fallthru
    _
  %v16 = vld [vmem:[%s2] sm:$0xff]
  %s17 = sld [smem:[#allocation2]]
  %v18 = vstv %s17
  %v19 = vmul.f32 %v16, %v18
  %s20 = sld [smem:[#allocation3]]
  %v21 = vstv %s20
  %v22 = vadd.f32 %v19, %v21
  %23 = vst [vmem:[%s3] sm:$0xff] %v22
  // Predicated region
  $region14: #{linear_forward.1} parent=0 // pred_check
    _
  $region15: #{linear_forward.1} parent=0 // pred_check_branch
    %25 = sbr.rel (0) target = $region17
  $region16: #{linear_forward.1} parent=0 // pred_region
    _
  $region17: #{linear_forward.1} parent=0 // pred_fallthru
    _
  // Predicated region
  $region18: #{linear_forward.1} parent=0 // pred_check
    _
  $region19: #{linear_forward.1} parent=0 // pred_check_branch
    %27 = sbr.rel (0) target = $region21
  $region20: #{linear_forward.1} parent=0 // pred_region
    _
  $region21: #{linear_forward.1} parent=0 // pred_fallthru
    _

</llo_original>
